<compile_context>
chip_gen: v6e
topology: v6e:2x2x1
jax: 0.10.0
libtpu: 0.0.40
codegen_flags: <defaults>
</compile_context>

<pallas_src>
import math

import jax
import jax.numpy as jnp
from jax.experimental import pallas as pl
from jax.experimental.pallas import tpu as pltpu


def _timestep_embedder_kernel(t_ref, freqs_ref, w1c_ref, w1s_ref, b1_ref,
                              w2_ref, b2_ref, o_ref):
    t = t_ref[...]                        # (bn, 1)    f32
    freqs = freqs_ref[...]                # (1, half)  f32
    args = t * freqs                      # (bn, half) broadcasted outer product

    # Sinusoidal embedding without a lane-axis concat: two accumulating dots
    # against the cos-rows / sin-rows of the first Linear's weight.
    cos_e = jnp.cos(args).astype(jnp.bfloat16)
    sin_e = jnp.sin(args).astype(jnp.bfloat16)

    h = jnp.dot(cos_e, w1c_ref[...], preferred_element_type=jnp.float32)
    h = h + jnp.dot(sin_e, w1s_ref[...], preferred_element_type=jnp.float32)
    h = h + b1_ref[...]                   # f32 accumulator + f32 bias
    h = h * jax.nn.sigmoid(h)             # SiLU in f32 (EUP slot, ~free)

    # Second Linear against the streamed (H, bc) column block of w2.
    out = jnp.dot(h.astype(jnp.bfloat16), w2_ref[...],
                  preferred_element_type=jnp.float32)
    o_ref[...] = (out + b2_ref[...]).astype(o_ref.dtype)


def _vmem_limit_bytes():
    """Generation-aware scoped-VMEM limit: ~75% of physical capacity."""
    cap = 64 * 1024 * 1024
    try:
        info = pltpu.get_tpu_info()
        cap = getattr(info, "vmem_capacity_bytes", cap) or cap
    except Exception:
        pass
    return min(int(cap * 0.75), 100 * 1024 * 1024)


def prepare_params(freqs, w1, b1, w2, b2):
    """One-time (init-time) weight prep.  NOT part of the per-call forward.

    Splits w1 into its cos-rows / sin-rows and pre-casts the matmul operands
    to bf16.  If frequency_embedding_size is odd, the PyTorch module appends a
    zero column to the embedding; its weight row (index 2*half) multiplies
    zero, so dropping it here is exact.
    """
    half = freqs.shape[-1]
    hidden = w2.shape[1]
    w1_cos = w1[:half].astype(jnp.bfloat16)            # (half, H)
    w1_sin = w1[half:2 * half].astype(jnp.bfloat16)    # (half, H)
    w2_bf = w2.astype(jnp.bfloat16)                    # (H, H)
    b1f = jnp.asarray(b1, jnp.float32).reshape(1, hidden)
    b2f = jnp.asarray(b2, jnp.float32).reshape(1, hidden)
    freqs2d = jnp.asarray(freqs, jnp.float32).reshape(1, half)
    return freqs2d, w1_cos, w1_sin, b1f, w2_bf, b2f


def timestep_embedder_forward(t, freqs, w1_cos, w1_sin, b1, w2, b2, *,
                              block_n=128, block_c=512):
    """t: (N,) float32 timesteps -> (N, hidden) embedding.

    Expects the pre-split / pre-cast parameters from prepare_params().
    """
    n = t.shape[0]
    half = freqs.shape[1]
    hidden = w2.shape[1]

    # Batch tile: multiple of 16 (full bf16 sublane pack), capped by block_n.
    bn = min(block_n, ((n + 15) // 16) * 16)
    bn = max(16, ((bn + 15) // 16) * 16)
    n_pad = pl.cdiv(n, bn) * bn

    # w2 output-column tile: multiple of 128 (lane-dense out block) dividing
    # hidden; fall back to the full width otherwise.
    if hidden % 128 == 0:
        bc = max(128, min((block_c // 128) * 128, hidden))
        if hidden % bc != 0:
            bc = 128
    else:
        bc = hidden

    t2d = t.astype(jnp.float32).reshape(n, 1)
    if n_pad != n:
        t2d = jnp.pad(t2d, ((0, n_pad - n), (0, 0)))

    const = lambda j, i: (0, 0)      # grid-invariant blocks stay resident in VMEM
    resident = pl.Buffered(1)        # single buffer: no pipelining needed for them

    out = pl.pallas_call(
        _timestep_embedder_kernel,
        out_shape=jax.ShapeDtypeStruct((n_pad, hidden), jnp.float32),
        # Column axis OUTERMOST: each w2 column block is fetched once and
        # stays put across the inner batch loop.
        grid=(hidden // bc, n_pad // bn),
        in_specs=[
            pl.BlockSpec((bn, 1), lambda j, i: (i, 0)),                    # t
            pl.BlockSpec((1, half), const, pipeline_mode=resident),        # freqs
            pl.BlockSpec((half, hidden), const, pipeline_mode=resident),   # w1_cos
            pl.BlockSpec((half, hidden), const, pipeline_mode=resident),   # w1_sin
            pl.BlockSpec((1, hidden), const, pipeline_mode=resident),      # b1
            pl.BlockSpec((hidden, bc), lambda j, i: (0, j)),               # w2 (streamed)
            pl.BlockSpec((1, bc), lambda j, i: (0, j)),                    # b2
        ],
        out_specs=pl.BlockSpec((bn, bc), lambda j, i: (i, j)),
        compiler_params=pltpu.CompilerParams(
            # Every grid step is independent (layer-1 recomputed per column
            # tile), so both axes are data-parallel; on v7x megacore the
            # column axis can be split so each TC streams half of w2.
            dimension_semantics=("parallel", "parallel"),
            vmem_limit_bytes=_vmem_limit_bytes(),
        ),
    )(t2d, freqs, w1_cos, w1_sin, b1, w2, b2)

    return out[:n]


def make_params(key, frequency_embedding_size, hidden_size, max_period=10000):
    """Deterministic synthetic f32 parameters (shapes match the PyTorch module)."""
    half = frequency_embedding_size // 2
    freqs = jnp.exp(
        -math.log(max_period)
        * jnp.arange(half, dtype=jnp.float32) / half
    ).reshape(1, half)

    k1, k2, k3, k4 = jax.random.split(key, 4)
    # Stored as (in_features, out_features) so the kernel does x @ W + b,
    # equivalent to torch.nn.Linear with W = weight.T.
    w1 = jax.random.normal(k1, (frequency_embedding_size, hidden_size),
                           jnp.float32) * 0.02
    b1 = jax.random.normal(k2, (1, hidden_size), jnp.float32) * 0.02
    w2 = jax.random.normal(k3, (hidden_size, hidden_size), jnp.float32) * 0.02
    b2 = jax.random.normal(k4, (1, hidden_size), jnp.float32) * 0.02
    return freqs, w1, b1, w2, b2


def reference_forward(t, freqs, w1, b1, w2, b2):
    """Plain-JAX f32 reference mirroring the PyTorch forward."""
    args = t.astype(jnp.float32)[:, None] * freqs  # (N, half)
    emb = jnp.concatenate([jnp.cos(args), jnp.sin(args)], axis=-1)
    h = emb @ w1 + b1
    h = h * jax.nn.sigmoid(h)
    return h @ w2 + b2


if __name__ == "__main__":
    # Small shapes: batch N=40, frequency_embedding_size=256 (module default),
    # hidden_size=256.  block_n=16 / block_c=128 so both grid axes (2 column
    # tiles x 3 batch tiles) and the N-padding path are actually exercised.
    N = 40
    FREQ_EMB = 256
    HIDDEN = 256

    key = jax.random.PRNGKey(0)
    kp, kt = jax.random.split(key)
    freqs, w1, b1, w2, b2 = make_params(kp, FREQ_EMB, HIDDEN)

    # One-time, init-style weight prep (NOT repeated per forward call).
    params = prepare_params(freqs, w1, b1, w2, b2)
    params = jax.block_until_ready(params)

    # Fractional timesteps, one per batch element.
    t = jax.random.uniform(kt, (N,), jnp.float32, minval=0.0, maxval=1000.0)

    out = timestep_embedder_forward(t, *params, block_n=16, block_c=128)
    out = jax.block_until_ready(out)

    ref = reference_forward(t, freqs, w1, b1, w2, b2)
    assert out.shape == (N, HIDDEN), out.shape
    # bf16 weights/activations with f32 accumulation vs. the pure-f32 reference.
    assert jnp.allclose(out, ref, atol=1e-2, rtol=1e-2), (
        float(jnp.max(jnp.abs(out - ref)))
    )
    print("KERNEL_OK")
</pallas_src>

<mosaic_0001>
module attributes {stable_mosaic.version = 11 : i64} {
  func.func @_timestep_embedder_kernel(%arg0: i32, %arg1: i32, %arg2: memref<16x1xf32, #tpu.memory_space<vmem>>, %arg3: memref<1x128xf32, #tpu.memory_space<vmem>>, %arg4: memref<128x256xbf16, #tpu.memory_space<vmem>>, %arg5: memref<128x256xbf16, #tpu.memory_space<vmem>>, %arg6: memref<1x256xf32, #tpu.memory_space<vmem>>, %arg7: memref<256x128xbf16, #tpu.memory_space<vmem>>, %arg8: memref<1x128xf32, #tpu.memory_space<vmem>>, %arg9: memref<16x128xf32, #tpu.memory_space<vmem>>) attributes {dimension_semantics = [#tpu.dimension_semantics<parallel>, #tpu.dimension_semantics<parallel>], iteration_bounds = array<i64: 2, 3>, scalar_prefetch = 0 : i64, scratch_operands = 0 : i64, tpu.core_type = #tpu.core_type<tc>, window_params = [{transform_indices = @transform_0, window_bounds = array<i64: 16, 1>}, {pipeline_mode = #tpu.pipeline_mode<synchronous>, transform_indices = @transform_1, window_bounds = array<i64: 1, 128>}, {pipeline_mode = #tpu.pipeline_mode<synchronous>, transform_indices = @transform_2, window_bounds = array<i64: 128, 256>}, {pipeline_mode = #tpu.pipeline_mode<synchronous>, transform_indices = @transform_3, window_bounds = array<i64: 128, 256>}, {pipeline_mode = #tpu.pipeline_mode<synchronous>, transform_indices = @transform_4, window_bounds = array<i64: 1, 256>}, {transform_indices = @transform_5, window_bounds = array<i64: 256, 128>}, {transform_indices = @transform_6, window_bounds = array<i64: 1, 128>}, {transform_indices = @transform_7, window_bounds = array<i64: 16, 128>}]} {
    %c0 = arith.constant 0 : index
    %c0_0 = arith.constant 0 : index
    %0 = vector.load %arg2[%c0, %c0_0] : memref<16x1xf32, #tpu.memory_space<vmem>>, vector<16x1xf32>
    %c0_1 = arith.constant 0 : index
    %c0_2 = arith.constant 0 : index
    %1 = vector.load %arg3[%c0_1, %c0_2] : memref<1x128xf32, #tpu.memory_space<vmem>>, vector<1x128xf32>
    %2 = vector.broadcast %0 : vector<16x1xf32> to vector<16x128xf32>
    %3 = vector.broadcast %1 : vector<1x128xf32> to vector<16x128xf32>
    %4 = arith.mulf %2, %3 : vector<16x128xf32>
    %5 = math.cos %4 : vector<16x128xf32>
    %6 = arith.truncf %5 : vector<16x128xf32> to vector<16x128xbf16>
    %7 = math.sin %4 : vector<16x128xf32>
    %8 = arith.truncf %7 : vector<16x128xf32> to vector<16x128xbf16>
    %c0_3 = arith.constant 0 : index
    %c0_4 = arith.constant 0 : index
    %9 = vector.load %arg4[%c0_3, %c0_4] : memref<128x256xbf16, #tpu.memory_space<vmem>>, vector<128x256xbf16>
    %cst = arith.constant dense<0.000000e+00> : vector<16x256xf32>
    %10 = tpu.matmul %6, %9, %cst {dimension_numbers = #tpu.dot_dimension_numbers<[1], [0], [0], [1], [0, 0, 1, 1], [], []>} : vector<16x128xbf16>, vector<128x256xbf16>, vector<16x256xf32> -> vector<16x256xf32>
    %c0_5 = arith.constant 0 : index
    %c0_6 = arith.constant 0 : index
    %11 = vector.load %arg5[%c0_5, %c0_6] : memref<128x256xbf16, #tpu.memory_space<vmem>>, vector<128x256xbf16>
    %cst_7 = arith.constant dense<0.000000e+00> : vector<16x256xf32>
    %12 = tpu.matmul %8, %11, %cst_7 {dimension_numbers = #tpu.dot_dimension_numbers<[1], [0], [0], [1], [0, 0, 1, 1], [], []>} : vector<16x128xbf16>, vector<128x256xbf16>, vector<16x256xf32> -> vector<16x256xf32>
    %13 = arith.addf %10, %12 : vector<16x256xf32>
    %c0_8 = arith.constant 0 : index
    %c0_9 = arith.constant 0 : index
    %14 = vector.load %arg6[%c0_8, %c0_9] : memref<1x256xf32, #tpu.memory_space<vmem>>, vector<1x256xf32>
    %15 = vector.broadcast %14 : vector<1x256xf32> to vector<16x256xf32>
    %16 = arith.addf %13, %15 : vector<16x256xf32>
    %17 = arith.negf %16 : vector<16x256xf32>
    %18 = math.exp %17 : vector<16x256xf32>
    %cst_10 = arith.constant 1.000000e+00 : f32
    %19 = vector.broadcast %cst_10 : f32 to vector<16x256xf32>
    %20 = arith.addf %19, %18 : vector<16x256xf32>
    %21 = arith.divf %19, %20 : vector<16x256xf32>
    %22 = arith.mulf %16, %21 : vector<16x256xf32>
    %23 = arith.truncf %22 : vector<16x256xf32> to vector<16x256xbf16>
    %c0_11 = arith.constant 0 : index
    %c0_12 = arith.constant 0 : index
    %24 = vector.load %arg7[%c0_11, %c0_12] : memref<256x128xbf16, #tpu.memory_space<vmem>>, vector<256x128xbf16>
    %cst_13 = arith.constant dense<0.000000e+00> : vector<16x128xf32>
    %25 = tpu.matmul %23, %24, %cst_13 {dimension_numbers = #tpu.dot_dimension_numbers<[1], [0], [0], [1], [0, 0, 1, 1], [], []>} : vector<16x256xbf16>, vector<256x128xbf16>, vector<16x128xf32> -> vector<16x128xf32>
    %c0_14 = arith.constant 0 : index
    %c0_15 = arith.constant 0 : index
    %26 = vector.load %arg8[%c0_14, %c0_15] : memref<1x128xf32, #tpu.memory_space<vmem>>, vector<1x128xf32>
    %27 = vector.broadcast %26 : vector<1x128xf32> to vector<16x128xf32>
    %28 = arith.addf %25, %27 : vector<16x128xf32>
    %c0_16 = arith.constant 0 : index
    %c0_17 = arith.constant 0 : index
    %29 = vector.load %arg9[%c0_16, %c0_17] : memref<16x128xf32, #tpu.memory_space<vmem>>, vector<16x128xf32>
    tpu.vector_store %arg9[%c0_16, %c0_17], %28 {strides = array<i32>} : memref<16x128xf32, #tpu.memory_space<vmem>>, vector<16x128xf32>,
    return
  }
  func.func @transform_0(%arg0: i32, %arg1: i32) -> (i32, i32) {
    %c0_i32 = arith.constant 0 : i32
    %c0_i32_0 = arith.constant 0 : i32
    return %arg1, %c0_i32 : i32, i32
  }
  func.func @transform_1(%arg0: i32, %arg1: i32) -> (i32, i32) {
    %c0_i32 = arith.constant 0 : i32
    %c0_i32_0 = arith.constant 0 : i32
    %c0_i32_1 = arith.constant 0 : i32
    return %c0_i32, %c0_i32_0 : i32, i32
  }
  func.func @transform_2(%arg0: i32, %arg1: i32) -> (i32, i32) {
    %c0_i32 = arith.constant 0 : i32
    %c0_i32_0 = arith.constant 0 : i32
    %c0_i32_1 = arith.constant 0 : i32
    return %c0_i32, %c0_i32_0 : i32, i32
  }
  func.func @transform_3(%arg0: i32, %arg1: i32) -> (i32, i32) {
    %c0_i32 = arith.constant 0 : i32
    %c0_i32_0 = arith.constant 0 : i32
    %c0_i32_1 = arith.constant 0 : i32
    return %c0_i32, %c0_i32_0 : i32, i32
  }
  func.func @transform_4(%arg0: i32, %arg1: i32) -> (i32, i32) {
    %c0_i32 = arith.constant 0 : i32
    %c0_i32_0 = arith.constant 0 : i32
    %c0_i32_1 = arith.constant 0 : i32
    return %c0_i32, %c0_i32_0 : i32, i32
  }
  func.func @transform_5(%arg0: i32, %arg1: i32) -> (i32, i32) {
    %c0_i32 = arith.constant 0 : i32
    %c0_i32_0 = arith.constant 0 : i32
    return %c0_i32, %arg0 : i32, i32
  }
  func.func @transform_6(%arg0: i32, %arg1: i32) -> (i32, i32) {
    %c0_i32 = arith.constant 0 : i32
    %c0_i32_0 = arith.constant 0 : i32
    return %c0_i32, %arg0 : i32, i32
  }
  func.func @transform_7(%arg0: i32, %arg1: i32) -> (i32, i32) {
    %c0_i32 = arith.constant 0 : i32
    return %arg1, %arg0 : i32, i32
  }
}

</mosaic_0001>

<llo_original>
// kernel: tpu_custom_call.1
$region0: #{tpu_custom_call.1}
  #allocation0 [shape = 'u32[]', space=smem, size = 0x4, offset = 0x4, fixed_abs, tag = 'smem constant byte address 0x4 - core index']
  #allocation1 [shape = 'u32[144,128]{1,0:T(1,128)}', space=vmem, size = 0x12000, scoped, tag = 'internal scratch']
  %s0 = inlined_call_operand.vmem [shape: f32[48,1], index: 0, kind: input, shape index: {}]
  %s1 = inlined_call_operand.vmem [shape: f32[1,128], index: 1, kind: input, shape index: {}]
  %s2 = inlined_call_operand.hbm [shape: bf16[128,256], index: 2, kind: input, shape index: {}]
  %s3 = inlined_call_operand.hbm [shape: bf16[128,256], index: 3, kind: input, shape index: {}]
  %s4 = inlined_call_operand.vmem [shape: f32[1,256], index: 4, kind: input, shape index: {}]
  %s5 = inlined_call_operand.hbm [shape: bf16[256,256], index: 5, kind: input, shape index: {}]
  %s6 = inlined_call_operand.vmem [shape: f32[1,256], index: 6, kind: input, shape index: {}]
  %s7 = inlined_call_operand.hbm [shape: f32[48,256], index: 7, kind: output, shape index: {}]
  %s8 = sld [smem:[#allocation0]]
  $region73: #{tpu_custom_call.1} parent=0
    _
  %s10 = ssub.s32 1, %s8
  %s11 = scalar_select 0, %s10, %s8
  $region1: #{tpu_custom_call.1} parent=0
    #allocation2 [shape = 'u8[65536]{0}', space=vmem, size = 0x10000, scoped, tag = 'input window, operand 2, single buffered']
    #allocation3 [shape = 's32[2]{0}', space=sflag, size = 0x8, scoped, tag = 'scoped memory for tpu_custom_call.1']
    #allocation4 [shape = 's32[2]{0}', space=sflag, size = 0x8, scoped, tag = 'scoped memory for tpu_custom_call.1']
    #allocation5 [shape = 'u8[65536]{0}', space=vmem, size = 0x10000, scoped, tag = 'input window, operand 3, single buffered']
    #allocation6 [shape = 's32[1]{0}', space=sflag, size = 0x4, scoped, tag = 'scoped memory for tpu_custom_call.1']
    #allocation7 [shape = 'u8[131072]{0}', space=vmem, size = 0x20000, scoped, tag = 'input window, operand 5']
    #allocation8 [shape = 'u8[16384]{0}', space=vmem, size = 0x4000, scoped, tag = 'output window, operand 0']
    %12 = vsyncpa [#allocation3], 0
    %13 = vsyncpa [#allocation6], 0
    %14 = vsyncpa [#allocation4], 0
    %s15 = scalar_lea.sflag [#allocation4], 1
    %16 = vsyncpa %s15, 0
    loop: start=0, step=1, limit=8
    $region2: #{tpu_custom_call.1} parent=1 // loop_pre_header
      _
    $region3: #{tpu_custom_call.1} parent=1 // loop_header
      %s18 = sphi 0, %s22
      %p19 = scmp.ge.s32.totalorder %s18, 8
      %s25 = sphi 0, %s37
      %s26 = sphi 0, %s33
      %s27 = sphi 0, %s25
      %s28 = sphi 0, %s26
      %s29 = sphi 0, %s27
      %s30 = sphi 0, %s28
      %s40 = sphi 0, %s42
      %s43 = sphi 0, %s40
      %s44 = sphi 0, %s43
      %s60 = sphi 0, %s44
      %s64 = sphi 0, %s64
      %s66 = sphi 0, %s64
      %s67 = sphi 0, %s66
      %s81 = sphi 0, %s67
      %s85 = sphi 0, %s85
      %s87 = sphi 0, %s85
      %s88 = sphi 0, %s87
      %s102 = sphi 0, %s88
      %s106 = sphi 0, %s106
      %s108 = sphi 0, %s106
      %s109 = sphi 0, %s108
      %s123 = sphi 0, %s109
      %s127 = sphi 0, %s127
      %s129 = sphi 0, %s127
      %s130 = sphi 0, %s129
      %s144 = sphi 0, %s130
      %s150 = sphi 0, %s152
      %s153 = sphi 0, %s150
      %s154 = sphi 0, %s153
      %s170 = sphi 0, %s154
      %s176 = sphi 0, %s178
      %s179 = sphi 0, %s176
      %s180 = sphi 0, %s179
      %s196 = sphi 0, %s180
      %s204 = sphi 0, %s206
      %s207 = sphi 0, %s204
      %s208 = sphi 0, %s207
      %s224 = sphi 0, %s208
    $region4: #{tpu_custom_call.1} parent=1 // loop_header_branch
      %21 = sbr.rel (%p19) target = $region8
    $region5: #{tpu_custom_call.1} parent=1 // loop_body
      %s23 = ssub.s32 %s18, 1
      %s24 = ssub.s32 %s18, 2
      %s31 = sadd.s32 1, %s26
      %p32 = scmp.ge.s32.totalorder %s31, 3
      %s33 = scalar_select %p32, 0, %s31
      %s34 = sadd.s32 1, %s25
      %s35 = scalar_select %p32, %s34, %s25
      %p36 = scmp.ge.s32.totalorder %s35, 2
      %s37 = scalar_select %p36, 0, %s35
      %s38 = ssub.s32 %s26, %s33
      %p39 = scmp.eq.s32.totalorder %s38, 0
      %s41 = sadd.s32 %s40, 1
      %s42 = scalar_select %p39, %s40, %s41
      %p45 = pneg %p39
      %p46 = scmp.eq.s32.totalorder %s18, 5
      %p47 = por %p45, %p46
      %p48 = scmp.ne.s32.totalorder %s40, %s43
      %p49 = scmp.eq.s32.totalorder %s18, 0
      %p50 = por %p48, %p49
      %p51 = scmp.ne.s32.totalorder %s40, %s43
      %p52 = scmp.eq.s32.totalorder %s23, 5
      %p53 = por %p51, %p52
      %p54 = scmp.ne.s32.totalorder %s43, %s44
      %p55 = scmp.eq.s32.totalorder %s23, 0
      %p56 = por %p54, %p55
      %p57 = scmp.ne.s32.totalorder %s43, %s44
      %p58 = scmp.eq.s32.totalorder %s24, 5
      %p59 = por %p57, %p58
      %p61 = scmp.ne.s32.totalorder %s44, %s60
      %p62 = scmp.eq.s32.totalorder %s24, 0
      %p63 = por %p61, %p62
      %s65 = sadd.s32 %s64, 1
      %p68 = scmp.eq.s32.totalorder %s18, 5
      %p69 = scmp.ne.s32.totalorder %s64, %s66
      %p70 = scmp.eq.s32.totalorder %s18, 0
      %p71 = por %p69, %p70
      %p72 = scmp.ne.s32.totalorder %s64, %s66
      %p73 = scmp.eq.s32.totalorder %s23, 5
      %p74 = por %p72, %p73
      %p75 = scmp.ne.s32.totalorder %s66, %s67
      %p76 = scmp.eq.s32.totalorder %s23, 0
      %p77 = por %p75, %p76
      %p78 = scmp.ne.s32.totalorder %s66, %s67
      %p79 = scmp.eq.s32.totalorder %s24, 5
      %p80 = por %p78, %p79
      %p82 = scmp.ne.s32.totalorder %s67, %s81
      %p83 = scmp.eq.s32.totalorder %s24, 0
      %p84 = por %p82, %p83
      %s86 = sadd.s32 %s85, 1
      %p89 = scmp.eq.s32.totalorder %s18, 5
      %p90 = scmp.ne.s32.totalorder %s85, %s87
      %p91 = scmp.eq.s32.totalorder %s18, 0
      %p92 = por %p90, %p91
      %p93 = scmp.ne.s32.totalorder %s85, %s87
      %p94 = scmp.eq.s32.totalorder %s23, 5
      %p95 = por %p93, %p94
      %p96 = scmp.ne.s32.totalorder %s87, %s88
      %p97 = scmp.eq.s32.totalorder %s23, 0
      %p98 = por %p96, %p97
      %p99 = scmp.ne.s32.totalorder %s87, %s88
      %p100 = scmp.eq.s32.totalorder %s24, 5
      %p101 = por %p99, %p100
      %p103 = scmp.ne.s32.totalorder %s88, %s102
      %p104 = scmp.eq.s32.totalorder %s24, 0
      %p105 = por %p103, %p104
      %s107 = sadd.s32 %s106, 1
      %p110 = scmp.eq.s32.totalorder %s18, 5
      %p111 = scmp.ne.s32.totalorder %s106, %s108
      %p112 = scmp.eq.s32.totalorder %s18, 0
      %p113 = por %p111, %p112
      %p114 = scmp.ne.s32.totalorder %s106, %s108
      %p115 = scmp.eq.s32.totalorder %s23, 5
      %p116 = por %p114, %p115
      %p117 = scmp.ne.s32.totalorder %s108, %s109
      %p118 = scmp.eq.s32.totalorder %s23, 0
      %p119 = por %p117, %p118
      %p120 = scmp.ne.s32.totalorder %s108, %s109
      %p121 = scmp.eq.s32.totalorder %s24, 5
      %p122 = por %p120, %p121
      %p124 = scmp.ne.s32.totalorder %s109, %s123
      %p125 = scmp.eq.s32.totalorder %s24, 0
      %p126 = por %p124, %p125
      %s128 = sadd.s32 %s127, 1
      %p131 = scmp.eq.s32.totalorder %s18, 5
      %p132 = scmp.ne.s32.totalorder %s127, %s129
      %p133 = scmp.eq.s32.totalorder %s18, 0
      %p134 = por %p132, %p133
      %p135 = scmp.ne.s32.totalorder %s127, %s129
      %p136 = scmp.eq.s32.totalorder %s23, 5
      %p137 = por %p135, %p136
      %p138 = scmp.ne.s32.totalorder %s129, %s130
      %p139 = scmp.eq.s32.totalorder %s23, 0
      %p140 = por %p138, %p139
      %p141 = scmp.ne.s32.totalorder %s129, %s130
      %p142 = scmp.eq.s32.totalorder %s24, 5
      %p143 = por %p141, %p142
      %p145 = scmp.ne.s32.totalorder %s130, %s144
      %p146 = scmp.eq.s32.totalorder %s24, 0
      %p147 = por %p145, %p146
      %s148 = ssub.s32 %s25, %s37
      %p149 = scmp.eq.s32.totalorder %s148, 0
      %s151 = sadd.s32 %s150, 1
      %s152 = scalar_select %p149, %s150, %s151
      %p155 = pneg %p149
      %p156 = scmp.eq.s32.totalorder %s18, 5
      %p157 = por %p155, %p156
      %p158 = scmp.ne.s32.totalorder %s150, %s153
      %p159 = scmp.eq.s32.totalorder %s18, 0
      %p160 = por %p158, %p159
      %p161 = scmp.ne.s32.totalorder %s150, %s153
      %p162 = scmp.eq.s32.totalorder %s23, 5
      %p163 = por %p161, %p162
      %p164 = scmp.ne.s32.totalorder %s153, %s154
      %p165 = scmp.eq.s32.totalorder %s23, 0
      %p166 = por %p164, %p165
      %p167 = scmp.ne.s32.totalorder %s153, %s154
      %p168 = scmp.eq.s32.totalorder %s24, 5
      %p169 = por %p167, %p168
      %p171 = scmp.ne.s32.totalorder %s154, %s170
      %p172 = scmp.eq.s32.totalorder %s24, 0
      %p173 = por %p171, %p172
      %s174 = ssub.s32 %s25, %s37
      %p175 = scmp.eq.s32.totalorder %s174, 0
      %s177 = sadd.s32 %s176, 1
      %s178 = scalar_select %p175, %s176, %s177
      %p181 = pneg %p175
      %p182 = scmp.eq.s32.totalorder %s18, 5
      %p183 = por %p181, %p182
      %p184 = scmp.ne.s32.totalorder %s176, %s179
      %p185 = scmp.eq.s32.totalorder %s18, 0
      %p186 = por %p184, %p185
      %p187 = scmp.ne.s32.totalorder %s176, %s179
      %p188 = scmp.eq.s32.totalorder %s23, 5
      %p189 = por %p187, %p188
      %p190 = scmp.ne.s32.totalorder %s179, %s180
      %p191 = scmp.eq.s32.totalorder %s23, 0
      %p192 = por %p190, %p191
      %p193 = scmp.ne.s32.totalorder %s179, %s180
      %p194 = scmp.eq.s32.totalorder %s24, 5
      %p195 = por %p193, %p194
      %p197 = scmp.ne.s32.totalorder %s180, %s196
      %p198 = scmp.eq.s32.totalorder %s24, 0
      %p199 = por %p197, %p198
      %s200 = ssub.s32 %s26, %s33
      %s201 = ssub.s32 %s25, %s37
      %s202 = sor.u32 %s200, %s201
      %p203 = scmp.eq.s32.totalorder %s202, 0
      %s205 = sadd.s32 %s204, 1
      %s206 = scalar_select %p203, %s204, %s205
      %p209 = pneg %p203
      %p210 = scmp.eq.s32.totalorder %s18, 5
      %p211 = por %p209, %p210
      %p212 = scmp.ne.s32.totalorder %s204, %s207
      %p213 = scmp.eq.s32.totalorder %s18, 0
      %p214 = por %p212, %p213
      %p215 = scmp.ne.s32.totalorder %s204, %s207
      %p216 = scmp.eq.s32.totalorder %s23, 5
      %p217 = por %p215, %p216
      %p218 = scmp.ne.s32.totalorder %s207, %s208
      %p219 = scmp.eq.s32.totalorder %s23, 0
      %p220 = por %p218, %p219
      %p221 = scmp.ne.s32.totalorder %s207, %s208
      %p222 = scmp.eq.s32.totalorder %s24, 5
      %p223 = por %p221, %p222
      %p225 = scmp.ne.s32.totalorder %s208, %s224
      %p226 = scmp.eq.s32.totalorder %s24, 0
      %p227 = por %p225, %p226
      %p228 = scmp.le.s32.totalorder 1, %s18
      %p229 = scmp.lt.s32.totalorder %s18, 7
      %p230 = pnand %p228, %p229
      %p231 = pneg %p230
      // Predicated region
      $region9: #{tpu_custom_call.1} parent=5 // pred_check
        _
      $region10: #{tpu_custom_call.1} parent=5 // pred_check_branch
        %233 = sbr.rel (%p230) target = $region12
      $region11: #{tpu_custom_call.1} parent=5 // pred_region
        %s234 = ssub.s32 %s18, 1
        // Predicated region
        $region13: #{tpu_custom_call.1} parent=11 // pred_check
          %p235 = pneg %p77
        $region14: #{tpu_custom_call.1} parent=11 // pred_check_branch
          %237 = sbr.rel (%p235) target = $region16
        $region15: #{tpu_custom_call.1} parent=11 // pred_region
          _
        $region16: #{tpu_custom_call.1} parent=11 // pred_fallthru
          _
        // Predicated region
        $region17: #{tpu_custom_call.1} parent=11 // pred_check
          %p238 = pneg %p98
        $region18: #{tpu_custom_call.1} parent=11 // pred_check_branch
          %240 = sbr.rel (%p238) target = $region20
        $region19: #{tpu_custom_call.1} parent=11 // pred_region
          %s242 = ssub.s32 2048, 2048
          %243 = vsyncadd [#allocation3], %s242
          %s244 = sshll.u32 [#allocation2], 4
          %s245 = int_to_ptr.vmem [resolvable:$true] %s244
          %250 = dma.hbm_to_vmem [thread:$0]  %s2, 2048, %s245, [#allocation3], 128, 128, 8
        $region20: #{tpu_custom_call.1} parent=11 // pred_fallthru
          _
        // Predicated region
        $region21: #{tpu_custom_call.1} parent=11 // pred_check
          %p251 = pneg %p119
        $region22: #{tpu_custom_call.1} parent=11 // pred_check_branch
          %253 = sbr.rel (%p251) target = $region24
        $region23: #{tpu_custom_call.1} parent=11 // pred_region
          %s255 = ssub.s32 2048, 2048
          %256 = vsyncadd [#allocation6], %s255
          %s257 = sshll.u32 [#allocation5], 4
          %s258 = int_to_ptr.vmem [resolvable:$true] %s257
          %263 = dma.hbm_to_vmem [thread:$0]  %s3, 2048, %s258, [#allocation6], 128, 128, 8
        $region24: #{tpu_custom_call.1} parent=11 // pred_fallthru
          _
        // Predicated region
        $region25: #{tpu_custom_call.1} parent=11 // pred_check
          %p264 = pneg %p140
        $region26: #{tpu_custom_call.1} parent=11 // pred_check_branch
          %266 = sbr.rel (%p264) target = $region28
        $region27: #{tpu_custom_call.1} parent=11 // pred_region
          _
        $region28: #{tpu_custom_call.1} parent=11 // pred_fallthru
          _
      $region12: #{tpu_custom_call.1} parent=5 // pred_fallthru
        _
      %p267 = scmp.lt.s32.totalorder %s18, 6
      // Predicated region
      $region29: #{tpu_custom_call.1} parent=5 // pred_check
        %p268 = pneg %p267
      $region30: #{tpu_custom_call.1} parent=5 // pred_check_branch
        %270 = sbr.rel (%p268) target = $region32
      $region31: #{tpu_custom_call.1} parent=5 // pred_region
        // Predicated region
        $region33: #{tpu_custom_call.1} parent=31 // pred_check
          %p271 = pneg %p50
        $region34: #{tpu_custom_call.1} parent=31 // pred_check_branch
          %273 = sbr.rel (%p271) target = $region36
        $region35: #{tpu_custom_call.1} parent=31 // pred_region
          %s274 = smul.u32 2, %s26
          %p275 = scmp.lt.s32.totalorder %s274, 5
          %s276 = scalar_select %p275, %s274, 5
          %s277 = smul.addr %s276, 8
          %s278 = scalar_lea.vmem %s0, %s277
          %s279 = smul.u32 2, %s26
        $region36: #{tpu_custom_call.1} parent=31 // pred_fallthru
          _
        // Predicated region
        $region37: #{tpu_custom_call.1} parent=31 // pred_check
          %p280 = pneg %p160
        $region38: #{tpu_custom_call.1} parent=31 // pred_check_branch
          %282 = sbr.rel (%p280) target = $region40
        $region39: #{tpu_custom_call.1} parent=31 // pred_region
          %s283 = sand.u32 %s18, 1
          %s284 = scalar_lea.sflag [#allocation3], %s283
          %s285 = sand.u32 %s150, 1
          %s286 = smul.addr %s285, 128
          %s287 = scalar_lea.vmem [#allocation7], %s286
          %s289 = ssub.s32 2048, 2048
          %290 = vsyncadd %s284, %s289
          %s291 = smul.addr %s25, 64
          %s292 = scalar_lea.hbm %s5, %s291
          %s293 = sshll.u32 %s287, 4
          %s294 = int_to_ptr.vmem [resolvable:$true] %s293
          %299 = dma.hbm_to_vmem [thread:$0]  %s292, 2048, %s294, %s284, 128, 64, 4
        $region40: #{tpu_custom_call.1} parent=31 // pred_fallthru
          _
        // Predicated region
        $region41: #{tpu_custom_call.1} parent=31 // pred_check
          %p300 = pneg %p186
        $region42: #{tpu_custom_call.1} parent=31 // pred_check_branch
          %302 = sbr.rel (%p300) target = $region44
        $region43: #{tpu_custom_call.1} parent=31 // pred_region
          %p303 = scmp.lt.s32.totalorder %s25, 1
          %s304 = scalar_select %p303, %s25, 1
          %s305 = scalar_lea.vmem %s6, %s304
        $region44: #{tpu_custom_call.1} parent=31 // pred_fallthru
          _
      $region32: #{tpu_custom_call.1} parent=5 // pred_fallthru
        _
      %p306 = scmp.le.s32.totalorder 1, %s18
      %p307 = scmp.lt.s32.totalorder %s18, 7
      %p308 = pnand %p306, %p307
      %p309 = pneg %p308
      // Predicated region
      $region45: #{tpu_custom_call.1} parent=5 // pred_check
        _
      $region46: #{tpu_custom_call.1} parent=5 // pred_check_branch
        %311 = sbr.rel (%p308) target = $region48
      $region47: #{tpu_custom_call.1} parent=5 // pred_region
        %s312 = ssub.s32 %s18, 1
        // Predicated region
        $region49: #{tpu_custom_call.1} parent=47 // pred_check
          %p313 = pneg %p98
        $region50: #{tpu_custom_call.1} parent=47 // pred_check_branch
          %315 = sbr.rel (%p313) target = $region52
        $region51: #{tpu_custom_call.1} parent=47 // pred_region
          %316 = dma.done [#allocation3], 2048
        $region52: #{tpu_custom_call.1} parent=47 // pred_fallthru
          _
        // Predicated region
        $region53: #{tpu_custom_call.1} parent=47 // pred_check
          %p317 = pneg %p119
        $region54: #{tpu_custom_call.1} parent=47 // pred_check_branch
          %319 = sbr.rel (%p317) target = $region56
        $region55: #{tpu_custom_call.1} parent=47 // pred_region
          %320 = dma.done [#allocation6], 2048
        $region56: #{tpu_custom_call.1} parent=47 // pred_fallthru
          _
        %s321 = sand.u32 %s23, 1
        %s322 = scalar_lea.sflag [#allocation3], %s321
        %s323 = sand.u32 %s153, 1
        %s324 = smul.addr %s323, 128
        %s325 = scalar_lea.vmem [#allocation7], %s324
        // Predicated region
        $region57: #{tpu_custom_call.1} parent=47 // pred_check
          %p326 = pneg %p166
        $region58: #{tpu_custom_call.1} parent=47 // pred_check_branch
          %328 = sbr.rel (%p326) target = $region60
        $region59: #{tpu_custom_call.1} parent=47 // pred_region
          %329 = dma.done %s322, 2048
        $region60: #{tpu_custom_call.1} parent=47 // pred_fallthru
          _
        %s330 = smul.u32 2, %s28
        %p331 = scmp.lt.s32.totalorder %s330, 5
        %s332 = scalar_select %p331, %s330, 5
        %s333 = smul.addr %s332, 8
        %s334 = scalar_lea.vmem %s0, %s333
        %p335 = pneg %p56
        %p336 = pneg %p53
        %p337 = pneg %p77
        %p338 = pneg %p74
        %p339 = pneg %p98
        %p340 = pneg %p95
        %p341 = pneg %p119
        %p342 = pneg %p116
        %p343 = pneg %p140
        %p344 = pneg %p137
        %s345 = sand.u32 %s23, 1
        %s346 = scalar_lea.sflag [#allocation3], %s345
        %s347 = sand.u32 %s153, 1
        %s348 = smul.addr %s347, 128
        %s349 = scalar_lea.vmem [#allocation7], %s348
        %p350 = pneg %p166
        %p351 = pneg %p163
        %p352 = scmp.lt.s32.totalorder %s27, 1
        %s353 = scalar_select %p352, %s27, 1
        %s354 = scalar_lea.vmem %s6, %s353
        %p355 = pneg %p192
        %p356 = pneg %p189
        %p357 = pneg %p220
        %p358 = pneg %p217
        %s359 = sand.u32 %s207, 1
        %s360 = scalar_lea.sflag [#allocation4], %s359
        %s361 = sand.u32 %s207, 1
        %s362 = smul.addr %s361, 16
        %s363 = scalar_lea.vmem [#allocation8], %s362
        %s364 = smul.u32 2, %s28
        %p365 = scmp.lt.s32.totalorder %s364, 5
        %s366 = scalar_select %p365, %s364, 5
        %s367 = smul.addr %s366, 8
        %s368 = scalar_lea.vmem %s0, %s367
        %s369 = smul.u32 2, %s28
        %p370 = scmp.lt.s32.totalorder %s27, 1
        %s371 = scalar_select %p370, %s27, 1
        %s372 = scalar_lea.vmem %s6, %s371
        %s373 = smul.u32 2, %s28
        %v375 = vld [vmem:[%s368] sm:$0xff]
        %v376 = vld [vmem:[%s368 + $0x8] sm:$0xff]
        %v377 = vld [vmem:[%s1] sm:$0x1]
        %379 = vset.pattern.permute.xlu0 0
        %380 = vperm.xlu0 %379, %v375
        %v381 = vpop.permute.xlu0 %380
        %384 = vset.pattern.permute.xlu0 0
        %385 = vperm.xlu0 %384, %v376
        %v386 = vpop.permute.xlu0 %385
        %v389 = vlaneseq
        %v390 = vshrl.u32 %v389, 7
        %v391 = vsub.s32 0, %v390
        %v392 = vrot.slane %v377, %v391
        %v394 = vmul.f32 %v381, %v392
        %v395 = vmul.f32 %v386, %v392
        %v396 = vand.u32 2147483647, %v394
        %vm397 = vcmp.le.f32.partialorder %v396, 0.7853982
        %vm398 = vcmp.lt.s32.totalorder %v394, 0
        %v399 = vand.u32 %v394, 2139095040
        %v400 = vshrl.u32 %v399, 23
        %v401 = vsub.s32 %v400, 127
        %v402 = vand.u32 2147483647, %v394
        %v403 = vand.u32 %v402, 8388607
        %v404 = vor.u32 %v403, 8388608
        %v405 = vsub.s32 0, %v404
        %v406 = vadd.s32 %v401, 1
        %vm407 = vcmp.gt.s32.totalorder %v406, 0
        %v408 = vsel %vm407, %v406, 0
        %v409 = vshrl.u32 %v408, 5
        %v410 = vand.u32 %v408, 31
        %v411 = vsub.s32 32, %v410
        %v412 = vshrl.u32 683565275, %v411
        %v413 = vshll.u32 683565275, %v410
        %v414 = vshrl.u32 2475754826, %v411
        %v415 = vor.u32 %v413, %v414
        %v416 = vshll.u32 2475754826, %v410
        %v417 = vshrl.u32 2131351028, %v411
        %v418 = vor.u32 %v416, %v417
        %v419 = vshll.u32 2131351028, %v410
        %v420 = vshrl.u32 2102212464, %v411
        %v421 = vor.u32 %v419, %v420
        %v422 = vshll.u32 2102212464, %v410
        %v423 = vshrl.u32 920167782, %v411
        %v424 = vor.u32 %v422, %v423
        %v425 = vshll.u32 920167782, %v410
        %v426 = vshrl.u32 1326507024, %v411
        %v427 = vor.u32 %v425, %v426
        %vm428 = vcmp.lt.s32.totalorder %v409, 1
        %vm429 = vcmp.lt.s32.totalorder %v409, 2
        %vm430 = vcmp.lt.s32.totalorder %v409, 3
        %vm431 = vcmp.lt.s32.totalorder %v409, 4
        %v432 = vsel %vm428, %v412, %v415
        %v433 = vsel %vm431, %v421, 2102212464
        %v434 = vsel %vm430, %v418, %v433
        %v435 = vsel %vm429, %v432, %v434
        %v436 = vsel %vm428, %v415, %v418
        %v437 = vsel %vm431, %v424, 920167782
        %v438 = vsel %vm430, %v421, %v437
        %v439 = vsel %vm429, %v436, %v438
        %v440 = vsel %vm428, %v418, %v421
        %v441 = vsel %vm431, %v427, 1326507024
        %v442 = vsel %vm430, %v424, %v441
        %v443 = vsel %vm429, %v440, %v442
        %v444 = vshll.u32 %v404, 8
        %v445 = vmul.u32.u64.compose %v444, %v443
        %v446 = vextract.low.u32 %v445
        %v447 = vextract.high.u32 %v445
        %v448 = vmul.u32.u64.compose %v444, %v439
        %v449 = vextract.low.u32 %v448
        %v450 = vextract.high.u32 %v448
        %v451 = vmul.u32 %v444, %v435
        %v452 = vadd.s32 %v447, %v449
        %vm453 = vc.u32 %v447, %v449
        %v454 = vadd.s32 %v450, 1
        %v455 = vsel %vm453, %v454, %v450
        %v456 = vadd.s32 %v451, %v455
        %v457 = vadd.s32 %v456, 536870912
        %v458 = vshrl.u32 %v457, 30
        %v459 = vshll.u32 %v458, 30
        %v460 = vsub.s32 %v456, %v459
        %vm461 = vcmp.lt.s32.totalorder %v460, 0
        %v462 = vsub.s32 0, %v460
        %v463 = vsel %vm461, %v462, %v460
        %v464 = vclz %v463
        %v465 = vsub.s32 %v464, 2
        %vm466 = vcmp.gt.s32.totalorder 0, %v465
        %v467 = vsel %vm466, 0, %v465
        %v468 = vsub.s32 32, %v467
        %v469 = vshll.u32 %v460, %v467
        %v470 = vshrl.u32 %v452, %v468
        %v471 = vor.u32 %v469, %v470
        %v472 = vsub.s32 4294967266, %v467
        %v473 = vadd.s32 %v472, 127
        %v474 = vshll.u32 %v473, 23
        %v475 = vor.u32 4788187, %v474
        %v476 = vand.u32 2147483647, %v475
        %v478 = vcvt.s32.f32 %v471
        %v479 = vmul.f32 %v478, %v476
        %v480 = vxor.u32 %v479, 2147483648
        %v481 = vsel %vm398, %v480, %v479
        %v482 = vsub.s32 4, %v458
        %v483 = vsel %vm398, %v482, %v458
        %v484 = vsel %vm397, %v394, %v481
        %v485 = vsel %vm397, 0, %v483
        %v486 = vcosq.f32.pop %v484
        %v487 = vsinq.f32.pop %v484
        %vm488 = vweird.f32 %v394
        %v489 = vand.u32 %v485, 3
        %vm490 = vcmp.lt.s32.totalorder %v489, 2
        %vm491 = vcmp.eq.s32.totalorder %v489, 0
        %v492 = vxor.u32 %v487, 2147483648
        %v493 = vsel %vm491, %v486, %v492
        %vm494 = vcmp.eq.s32.totalorder %v489, 2
        %v495 = vxor.u32 %v486, 2147483648
        %v496 = vsel %vm494, %v495, %v487
        %v497 = vsel %vm490, %v493, %v496
        %v498 = vsel %vm488, nan, %v497
        %v499 = vand.u32 2147483647, %v395
        %vm500 = vcmp.le.f32.partialorder %v499, 0.7853982
        %vm501 = vcmp.lt.s32.totalorder %v395, 0
        %v502 = vand.u32 %v395, 2139095040
        %v503 = vshrl.u32 %v502, 23
        %v504 = vsub.s32 %v503, 127
        %v505 = vand.u32 2147483647, %v395
        %v506 = vand.u32 %v505, 8388607
        %v507 = vor.u32 %v506, 8388608
        %v508 = vsub.s32 0, %v507
        %v509 = vadd.s32 %v504, 1
        %vm510 = vcmp.gt.s32.totalorder %v509, 0
        %v511 = vsel %vm510, %v509, 0
        %v512 = vshrl.u32 %v511, 5
        %v513 = vand.u32 %v511, 31
        %v514 = vsub.s32 32, %v513
        %v515 = vshrl.u32 683565275, %v514
        %v516 = vshll.u32 683565275, %v513
        %v517 = vshrl.u32 2475754826, %v514
        %v518 = vor.u32 %v516, %v517
        %v519 = vshll.u32 2475754826, %v513
        %v520 = vshrl.u32 2131351028, %v514
        %v521 = vor.u32 %v519, %v520
        %v522 = vshll.u32 2131351028, %v513
        %v523 = vshrl.u32 2102212464, %v514
        %v524 = vor.u32 %v522, %v523
        %v525 = vshll.u32 2102212464, %v513
        %v526 = vshrl.u32 920167782, %v514
        %v527 = vor.u32 %v525, %v526
        %v528 = vshll.u32 920167782, %v513
        %v529 = vshrl.u32 1326507024, %v514
        %v530 = vor.u32 %v528, %v529
        %vm531 = vcmp.lt.s32.totalorder %v512, 1
        %vm532 = vcmp.lt.s32.totalorder %v512, 2
        %vm533 = vcmp.lt.s32.totalorder %v512, 3
        %vm534 = vcmp.lt.s32.totalorder %v512, 4
        %v535 = vsel %vm531, %v515, %v518
        %v536 = vsel %vm534, %v524, 2102212464
        %v537 = vsel %vm533, %v521, %v536
        %v538 = vsel %vm532, %v535, %v537
        %v539 = vsel %vm531, %v518, %v521
        %v540 = vsel %vm534, %v527, 920167782
        %v541 = vsel %vm533, %v524, %v540
        %v542 = vsel %vm532, %v539, %v541
        %v543 = vsel %vm531, %v521, %v524
        %v544 = vsel %vm534, %v530, 1326507024
        %v545 = vsel %vm533, %v527, %v544
        %v546 = vsel %vm532, %v543, %v545
        %v547 = vshll.u32 %v507, 8
        %v548 = vmul.u32.u64.compose %v547, %v546
        %v549 = vextract.low.u32 %v548
        %v550 = vextract.high.u32 %v548
        %v551 = vmul.u32.u64.compose %v547, %v542
        %v552 = vextract.low.u32 %v551
        %v553 = vextract.high.u32 %v551
        %v554 = vmul.u32 %v547, %v538
        %v555 = vadd.s32 %v550, %v552
        %vm556 = vc.u32 %v550, %v552
        %v557 = vadd.s32 %v553, 1
        %v558 = vsel %vm556, %v557, %v553
        %v559 = vadd.s32 %v554, %v558
        %v560 = vadd.s32 %v559, 536870912
        %v561 = vshrl.u32 %v560, 30
        %v562 = vshll.u32 %v561, 30
        %v563 = vsub.s32 %v559, %v562
        %vm564 = vcmp.lt.s32.totalorder %v563, 0
        %v565 = vsub.s32 0, %v563
        %v566 = vsel %vm564, %v565, %v563
        %v567 = vclz %v566
        %v568 = vsub.s32 %v567, 2
        %vm569 = vcmp.gt.s32.totalorder 0, %v568
        %v570 = vsel %vm569, 0, %v568
        %v571 = vsub.s32 32, %v570
        %v572 = vshll.u32 %v563, %v570
        %v573 = vshrl.u32 %v555, %v571
        %v574 = vor.u32 %v572, %v573
        %v575 = vsub.s32 4294967266, %v570
        %v576 = vadd.s32 %v575, 127
        %v577 = vshll.u32 %v576, 23
        %v578 = vor.u32 4788187, %v577
        %v579 = vand.u32 2147483647, %v578
        %v581 = vcvt.s32.f32 %v574
        %v582 = vmul.f32 %v581, %v579
        %v583 = vxor.u32 %v582, 2147483648
        %v584 = vsel %vm501, %v583, %v582
        %v585 = vsub.s32 4, %v561
        %v586 = vsel %vm501, %v585, %v561
        %v587 = vsel %vm500, %v395, %v584
        %v588 = vsel %vm500, 0, %v586
        %v589 = vcosq.f32.pop %v587
        %v590 = vsinq.f32.pop %v587
        %vm591 = vweird.f32 %v395
        %v592 = vand.u32 %v588, 3
        %vm593 = vcmp.lt.s32.totalorder %v592, 2
        %vm594 = vcmp.eq.s32.totalorder %v592, 0
        %v595 = vxor.u32 %v590, 2147483648
        %v596 = vsel %vm594, %v589, %v595
        %vm597 = vcmp.eq.s32.totalorder %v592, 2
        %v598 = vxor.u32 %v589, 2147483648
        %v599 = vsel %vm597, %v598, %v590
        %v600 = vsel %vm593, %v596, %v599
        %v601 = vsel %vm591, nan, %v600
        %v602 = vpack.c.bf16 %v601, %v498
        %v603 = vand.u32 2147483647, %v394
        %vm604 = vcmp.le.f32.partialorder %v603, 0.7853982
        %vm605 = vcmp.lt.s32.totalorder %v394, 0
        %v606 = vand.u32 %v394, 2139095040
        %v607 = vshrl.u32 %v606, 23
        %v608 = vsub.s32 %v607, 127
        %v609 = vand.u32 2147483647, %v394
        %v610 = vand.u32 %v609, 8388607
        %v611 = vor.u32 %v610, 8388608
        %v612 = vsub.s32 0, %v611
        %v613 = vadd.s32 %v608, 1
        %vm614 = vcmp.gt.s32.totalorder %v613, 0
        %v615 = vsel %vm614, %v613, 0
        %v616 = vshrl.u32 %v615, 5
        %v617 = vand.u32 %v615, 31
        %v618 = vsub.s32 32, %v617
        %v619 = vshrl.u32 683565275, %v618
        %v620 = vshll.u32 683565275, %v617
        %v621 = vshrl.u32 2475754826, %v618
        %v622 = vor.u32 %v620, %v621
        %v623 = vshll.u32 2475754826, %v617
        %v624 = vshrl.u32 2131351028, %v618
        %v625 = vor.u32 %v623, %v624
        %v626 = vshll.u32 2131351028, %v617
        %v627 = vshrl.u32 2102212464, %v618
        %v628 = vor.u32 %v626, %v627
        %v629 = vshll.u32 2102212464, %v617
        %v630 = vshrl.u32 920167782, %v618
        %v631 = vor.u32 %v629, %v630
        %v632 = vshll.u32 920167782, %v617
        %v633 = vshrl.u32 1326507024, %v618
        %v634 = vor.u32 %v632, %v633
        %vm635 = vcmp.lt.s32.totalorder %v616, 1
        %vm636 = vcmp.lt.s32.totalorder %v616, 2
        %vm637 = vcmp.lt.s32.totalorder %v616, 3
        %vm638 = vcmp.lt.s32.totalorder %v616, 4
        %v639 = vsel %vm635, %v619, %v622
        %v640 = vsel %vm638, %v628, 2102212464
        %v641 = vsel %vm637, %v625, %v640
        %v642 = vsel %vm636, %v639, %v641
        %v643 = vsel %vm635, %v622, %v625
        %v644 = vsel %vm638, %v631, 920167782
        %v645 = vsel %vm637, %v628, %v644
        %v646 = vsel %vm636, %v643, %v645
        %v647 = vsel %vm635, %v625, %v628
        %v648 = vsel %vm638, %v634, 1326507024
        %v649 = vsel %vm637, %v631, %v648
        %v650 = vsel %vm636, %v647, %v649
        %v651 = vshll.u32 %v611, 8
        %v652 = vmul.u32.u64.compose %v651, %v650
        %v653 = vextract.low.u32 %v652
        %v654 = vextract.high.u32 %v652
        %v655 = vmul.u32.u64.compose %v651, %v646
        %v656 = vextract.low.u32 %v655
        %v657 = vextract.high.u32 %v655
        %v658 = vmul.u32 %v651, %v642
        %v659 = vadd.s32 %v654, %v656
        %vm660 = vc.u32 %v654, %v656
        %v661 = vadd.s32 %v657, 1
        %v662 = vsel %vm660, %v661, %v657
        %v663 = vadd.s32 %v658, %v662
        %v664 = vadd.s32 %v663, 536870912
        %v665 = vshrl.u32 %v664, 30
        %v666 = vshll.u32 %v665, 30
        %v667 = vsub.s32 %v663, %v666
        %vm668 = vcmp.lt.s32.totalorder %v667, 0
        %v669 = vsub.s32 0, %v667
        %v670 = vsel %vm668, %v669, %v667
        %v671 = vclz %v670
        %v672 = vsub.s32 %v671, 2
        %vm673 = vcmp.gt.s32.totalorder 0, %v672
        %v674 = vsel %vm673, 0, %v672
        %v675 = vsub.s32 32, %v674
        %v676 = vshll.u32 %v667, %v674
        %v677 = vshrl.u32 %v659, %v675
        %v678 = vor.u32 %v676, %v677
        %v679 = vsub.s32 4294967266, %v674
        %v680 = vadd.s32 %v679, 127
        %v681 = vshll.u32 %v680, 23
        %v682 = vor.u32 4788187, %v681
        %v683 = vand.u32 2147483647, %v682
        %v685 = vcvt.s32.f32 %v678
        %v686 = vmul.f32 %v685, %v683
        %v687 = vxor.u32 %v686, 2147483648
        %v688 = vsel %vm605, %v687, %v686
        %v689 = vsub.s32 4, %v665
        %v690 = vsel %vm605, %v689, %v665
        %v691 = vsel %vm604, %v394, %v688
        %v692 = vsel %vm604, 0, %v690
        %v693 = vcosq.f32.pop %v691
        %v694 = vsinq.f32.pop %v691
        %vm695 = vweird.f32 %v394
        %v696 = vadd.s32 %v692, 3
        %v697 = vand.u32 %v696, 3
        %vm698 = vcmp.lt.s32.totalorder %v697, 2
        %vm699 = vcmp.eq.s32.totalorder %v697, 0
        %v700 = vxor.u32 %v694, 2147483648
        %v701 = vsel %vm699, %v693, %v700
        %vm702 = vcmp.eq.s32.totalorder %v697, 2
        %v703 = vxor.u32 %v693, 2147483648
        %v704 = vsel %vm702, %v703, %v694
        %v705 = vsel %vm698, %v701, %v704
        %v706 = vsel %vm695, nan, %v705
        %v707 = vand.u32 2147483647, %v395
        %vm708 = vcmp.le.f32.partialorder %v707, 0.7853982
        %vm709 = vcmp.lt.s32.totalorder %v395, 0
        %v710 = vand.u32 %v395, 2139095040
        %v711 = vshrl.u32 %v710, 23
        %v712 = vsub.s32 %v711, 127
        %v713 = vand.u32 2147483647, %v395
        %v714 = vand.u32 %v713, 8388607
        %v715 = vor.u32 %v714, 8388608
        %v716 = vsub.s32 0, %v715
        %v717 = vadd.s32 %v712, 1
        %vm718 = vcmp.gt.s32.totalorder %v717, 0
        %v719 = vsel %vm718, %v717, 0
        %v720 = vshrl.u32 %v719, 5
        %v721 = vand.u32 %v719, 31
        %v722 = vsub.s32 32, %v721
        %v723 = vshrl.u32 683565275, %v722
        %v724 = vshll.u32 683565275, %v721
        %v725 = vshrl.u32 2475754826, %v722
        %v726 = vor.u32 %v724, %v725
        %v727 = vshll.u32 2475754826, %v721
        %v728 = vshrl.u32 2131351028, %v722
        %v729 = vor.u32 %v727, %v728
        %v730 = vshll.u32 2131351028, %v721
        %v731 = vshrl.u32 2102212464, %v722
        %v732 = vor.u32 %v730, %v731
        %v733 = vshll.u32 2102212464, %v721
        %v734 = vshrl.u32 920167782, %v722
        %v735 = vor.u32 %v733, %v734
        %v736 = vshll.u32 920167782, %v721
        %v737 = vshrl.u32 1326507024, %v722
        %v738 = vor.u32 %v736, %v737
        %vm739 = vcmp.lt.s32.totalorder %v720, 1
        %vm740 = vcmp.lt.s32.totalorder %v720, 2
        %vm741 = vcmp.lt.s32.totalorder %v720, 3
        %vm742 = vcmp.lt.s32.totalorder %v720, 4
        %v743 = vsel %vm739, %v723, %v726
        %v744 = vsel %vm742, %v732, 2102212464
        %v745 = vsel %vm741, %v729, %v744
        %v746 = vsel %vm740, %v743, %v745
        %v747 = vsel %vm739, %v726, %v729
        %v748 = vsel %vm742, %v735, 920167782
        %v749 = vsel %vm741, %v732, %v748
        %v750 = vsel %vm740, %v747, %v749
        %v751 = vsel %vm739, %v729, %v732
        %v752 = vsel %vm742, %v738, 1326507024
        %v753 = vsel %vm741, %v735, %v752
        %v754 = vsel %vm740, %v751, %v753
        %v755 = vshll.u32 %v715, 8
        %v756 = vmul.u32.u64.compose %v755, %v754
        %v757 = vextract.low.u32 %v756
        %v758 = vextract.high.u32 %v756
        %v759 = vmul.u32.u64.compose %v755, %v750
        %v760 = vextract.low.u32 %v759
        %v761 = vextract.high.u32 %v759
        %v762 = vmul.u32 %v755, %v746
        %v763 = vadd.s32 %v758, %v760
        %vm764 = vc.u32 %v758, %v760
        %v765 = vadd.s32 %v761, 1
        %v766 = vsel %vm764, %v765, %v761
        %v767 = vadd.s32 %v762, %v766
        %v768 = vadd.s32 %v767, 536870912
        %v769 = vshrl.u32 %v768, 30
        %v770 = vshll.u32 %v769, 30
        %v771 = vsub.s32 %v767, %v770
        %vm772 = vcmp.lt.s32.totalorder %v771, 0
        %v773 = vsub.s32 0, %v771
        %v774 = vsel %vm772, %v773, %v771
        %v775 = vclz %v774
        %v776 = vsub.s32 %v775, 2
        %vm777 = vcmp.gt.s32.totalorder 0, %v776
        %v778 = vsel %vm777, 0, %v776
        %v779 = vsub.s32 32, %v778
        %v780 = vshll.u32 %v771, %v778
        %v781 = vshrl.u32 %v763, %v779
        %v782 = vor.u32 %v780, %v781
        %v783 = vsub.s32 4294967266, %v778
        %v784 = vadd.s32 %v783, 127
        %v785 = vshll.u32 %v784, 23
        %v786 = vor.u32 4788187, %v785
        %v787 = vand.u32 2147483647, %v786
        %v789 = vcvt.s32.f32 %v782
        %v790 = vmul.f32 %v789, %v787
        %v791 = vxor.u32 %v790, 2147483648
        %v792 = vsel %vm709, %v791, %v790
        %v793 = vsub.s32 4, %v769
        %v794 = vsel %vm709, %v793, %v769
        %v795 = vsel %vm708, %v395, %v792
        %v796 = vsel %vm708, 0, %v794
        %v797 = vcosq.f32.pop %v795
        %v798 = vsinq.f32.pop %v795
        %vm799 = vweird.f32 %v395
        %v800 = vadd.s32 %v796, 3
        %v801 = vand.u32 %v800, 3
        %vm802 = vcmp.lt.s32.totalorder %v801, 2
        %vm803 = vcmp.eq.s32.totalorder %v801, 0
        %v804 = vxor.u32 %v798, 2147483648
        %v805 = vsel %vm803, %v797, %v804
        %vm806 = vcmp.eq.s32.totalorder %v801, 2
        %v807 = vxor.u32 %v797, 2147483648
        %v808 = vsel %vm806, %v807, %v798
        %v809 = vsel %vm802, %v805, %v808
        %v810 = vsel %vm799, nan, %v809
        %v811 = vpack.c.bf16 %v810, %v706
        %v812 = vld [vmem:[#allocation2] sm:$0xff]
        %v813 = vld [vmem:[#allocation2 + $0x8] sm:$0xff]
        %v814 = vld [vmem:[#allocation2 + $0x10] sm:$0xff]
        %v815 = vld [vmem:[#allocation2 + $0x18] sm:$0xff]
        %v816 = vld [vmem:[#allocation2 + $0x20] sm:$0xff]
        %v817 = vld [vmem:[#allocation2 + $0x28] sm:$0xff]
        %v818 = vld [vmem:[#allocation2 + $0x30] sm:$0xff]
        %v819 = vld [vmem:[#allocation2 + $0x38] sm:$0xff]
        %v820 = vld [vmem:[#allocation2 + $0x40] sm:$0xff]
        %v821 = vld [vmem:[#allocation2 + $0x48] sm:$0xff]
        %v822 = vld [vmem:[#allocation2 + $0x50] sm:$0xff]
        %v823 = vld [vmem:[#allocation2 + $0x58] sm:$0xff]
        %v824 = vld [vmem:[#allocation2 + $0x60] sm:$0xff]
        %v825 = vld [vmem:[#allocation2 + $0x68] sm:$0xff]
        %v826 = vld [vmem:[#allocation2 + $0x70] sm:$0xff]
        %v827 = vld [vmem:[#allocation2 + $0x78] sm:$0xff]
        %v828 = vld [vmem:[#allocation5] sm:$0xff]
        %v829 = vld [vmem:[#allocation5 + $0x8] sm:$0xff]
        %v830 = vld [vmem:[#allocation5 + $0x10] sm:$0xff]
        %v831 = vld [vmem:[#allocation5 + $0x18] sm:$0xff]
        %v832 = vld [vmem:[#allocation5 + $0x20] sm:$0xff]
        %v833 = vld [vmem:[#allocation5 + $0x28] sm:$0xff]
        %v834 = vld [vmem:[#allocation5 + $0x30] sm:$0xff]
        %v835 = vld [vmem:[#allocation5 + $0x38] sm:$0xff]
        %v836 = vld [vmem:[#allocation5 + $0x40] sm:$0xff]
        %v837 = vld [vmem:[#allocation5 + $0x48] sm:$0xff]
        %v838 = vld [vmem:[#allocation5 + $0x50] sm:$0xff]
        %v839 = vld [vmem:[#allocation5 + $0x58] sm:$0xff]
        %v840 = vld [vmem:[#allocation5 + $0x60] sm:$0xff]
        %v841 = vld [vmem:[#allocation5 + $0x68] sm:$0xff]
        %v842 = vld [vmem:[#allocation5 + $0x70] sm:$0xff]
        %v843 = vld [vmem:[#allocation5 + $0x78] sm:$0xff]
        %v860 = vunpack.c.l.b16 %v828
        %v861 = vunpack.c.h.b16 %v828
        %v862 = vunpack.c.l.b16 %v829
        %v863 = vunpack.c.h.b16 %v829
        %v864 = vunpack.c.l.b16 %v830
        %v865 = vunpack.c.h.b16 %v830
        %v866 = vunpack.c.l.b16 %v831
        %v867 = vunpack.c.h.b16 %v831
        %v868 = vunpack.c.l.b16 %v832
        %v869 = vunpack.c.h.b16 %v832
        %v870 = vunpack.c.l.b16 %v833
        %v871 = vunpack.c.h.b16 %v833
        %v872 = vunpack.c.l.b16 %v834
        %v873 = vunpack.c.h.b16 %v834
        %v874 = vunpack.c.l.b16 %v835
        %v875 = vunpack.c.h.b16 %v835
        %v876 = vunpack.c.l.b16 %v836
        %v877 = vunpack.c.h.b16 %v836
        %v878 = vunpack.c.l.b16 %v837
        %v879 = vunpack.c.h.b16 %v837
        %v880 = vunpack.c.l.b16 %v838
        %v881 = vunpack.c.h.b16 %v838
        %v882 = vunpack.c.l.b16 %v839
        %v883 = vunpack.c.h.b16 %v839
        %v884 = vunpack.c.l.b16 %v840
        %v885 = vunpack.c.h.b16 %v840
        %v886 = vunpack.c.l.b16 %v841
        %v887 = vunpack.c.h.b16 %v841
        %v888 = vunpack.c.l.b16 %v842
        %v889 = vunpack.c.h.b16 %v842
        %v890 = vunpack.c.l.b16 %v843
        %v891 = vunpack.c.h.b16 %v843
        %v892 = vpack.c.b16 %v862, %v860
        %v893 = vpack.c.b16 %v863, %v861
        %v894 = vpack.c.b16 %v866, %v864
        %v895 = vpack.c.b16 %v867, %v865
        %v896 = vpack.c.b16 %v870, %v868
        %v897 = vpack.c.b16 %v871, %v869
        %v898 = vpack.c.b16 %v874, %v872
        %v899 = vpack.c.b16 %v875, %v873
        %v900 = vpack.c.b16 %v878, %v876
        %v901 = vpack.c.b16 %v879, %v877
        %v902 = vpack.c.b16 %v882, %v880
        %v903 = vpack.c.b16 %v883, %v881
        %v904 = vpack.c.b16 %v886, %v884
        %v905 = vpack.c.b16 %v887, %v885
        %v906 = vpack.c.b16 %v890, %v888
        %v907 = vpack.c.b16 %v891, %v889
        %924 = vmatprep.subr.bf16.mxu0 %v907
        %925 = vmatpush1.bf16.msra.mxu0 %v906
        %926 = vmatprep.subr.bf16.mxu0 %v905
        %927 = vmatpush1.bf16.msra.mxu0 %v904
        %928 = vmatprep.subr.bf16.mxu0 %v903
        %929 = vmatpush1.bf16.msra.mxu0 %v902
        %930 = vmatprep.subr.bf16.mxu0 %v901
        %931 = vmatpush1.bf16.msra.mxu0 %v900
        %932 = vmatprep.subr.bf16.mxu0 %v899
        %933 = vmatpush1.bf16.msra.mxu0 %v898
        %934 = vmatprep.subr.bf16.mxu0 %v897
        %935 = vmatpush1.bf16.msra.mxu0 %v896
        %936 = vmatprep.subr.bf16.mxu0 %v895
        %937 = vmatpush1.bf16.msra.mxu0 %v894
        %938 = vmatprep.subr.bf16.mxu0 %v893
        %939 = vmatpush1.bf16.msra.mxu0 %v892
        %940 = vmatprep.subr.bf16.mxu0 0
        %941 = vmatpush2.bf16.msra.mxu0 0
        %942 = vmatprep.subr.bf16.mxu0 0
        %943 = vmatpush2.bf16.msra.mxu0 0
        %944 = vmatprep.subr.bf16.mxu0 0
        %945 = vmatpush2.bf16.msra.mxu0 0
        %946 = vmatprep.subr.bf16.mxu0 0
        %947 = vmatpush2.bf16.msra.mxu0 0
        %948 = vmatprep.subr.bf16.mxu0 0
        %949 = vmatpush2.bf16.msra.mxu0 0
        %950 = vmatprep.subr.bf16.mxu0 0
        %951 = vmatpush2.bf16.msra.mxu0 0
        %952 = vmatprep.subr.bf16.mxu0 0
        %953 = vmatpush2.bf16.msra.mxu0 0
        %954 = vmatprep.subr.bf16.mxu0 0
        %955 = vmatpush2.bf16.msra.mxu0 0
        %956 = vmatprep.mubr.bf16.mxu0 0
        %957 = vmatmul.mubr.bf16.gmra.mxu0 %v811
        %v958 = vpop.f32.mrf.mxu0
        %v959 = vadd.f32 0.0, %v958
        %v960 = vpop.f32.mrf.mxu0
        %v961 = vadd.f32 0.0, %v960
        %v962 = vpop.f32.mrf.mxu0
        %v963 = vadd.f32 0.0, %v962
        %v964 = vpop.f32.mrf.mxu0
        %v965 = vadd.f32 0.0, %v964
        %966 = vdwg.mxu0
        %v983 = vunpack.c.l.b16 %v812
        %v984 = vunpack.c.h.b16 %v812
        %v985 = vunpack.c.l.b16 %v813
        %v986 = vunpack.c.h.b16 %v813
        %v987 = vunpack.c.l.b16 %v814
        %v988 = vunpack.c.h.b16 %v814
        %v989 = vunpack.c.l.b16 %v815
        %v990 = vunpack.c.h.b16 %v815
        %v991 = vunpack.c.l.b16 %v816
        %v992 = vunpack.c.h.b16 %v816
        %v993 = vunpack.c.l.b16 %v817
        %v994 = vunpack.c.h.b16 %v817
        %v995 = vunpack.c.l.b16 %v818
        %v996 = vunpack.c.h.b16 %v818
        %v997 = vunpack.c.l.b16 %v819
        %v998 = vunpack.c.h.b16 %v819
        %v999 = vunpack.c.l.b16 %v820
        %v1000 = vunpack.c.h.b16 %v820
        %v1001 = vunpack.c.l.b16 %v821
        %v1002 = vunpack.c.h.b16 %v821
        %v1003 = vunpack.c.l.b16 %v822
        %v1004 = vunpack.c.h.b16 %v822
        %v1005 = vunpack.c.l.b16 %v823
        %v1006 = vunpack.c.h.b16 %v823
        %v1007 = vunpack.c.l.b16 %v824
        %v1008 = vunpack.c.h.b16 %v824
        %v1009 = vunpack.c.l.b16 %v825
        %v1010 = vunpack.c.h.b16 %v825
        %v1011 = vunpack.c.l.b16 %v826
        %v1012 = vunpack.c.h.b16 %v826
        %v1013 = vunpack.c.l.b16 %v827
        %v1014 = vunpack.c.h.b16 %v827
        %v1015 = vpack.c.b16 %v985, %v983
        %v1016 = vpack.c.b16 %v986, %v984
        %v1017 = vpack.c.b16 %v989, %v987
        %v1018 = vpack.c.b16 %v990, %v988
        %v1019 = vpack.c.b16 %v993, %v991
        %v1020 = vpack.c.b16 %v994, %v992
        %v1021 = vpack.c.b16 %v997, %v995
        %v1022 = vpack.c.b16 %v998, %v996
        %v1023 = vpack.c.b16 %v1001, %v999
        %v1024 = vpack.c.b16 %v1002, %v1000
        %v1025 = vpack.c.b16 %v1005, %v1003
        %v1026 = vpack.c.b16 %v1006, %v1004
        %v1027 = vpack.c.b16 %v1009, %v1007
        %v1028 = vpack.c.b16 %v1010, %v1008
        %v1029 = vpack.c.b16 %v1013, %v1011
        %v1030 = vpack.c.b16 %v1014, %v1012
        %1047 = vmatprep.subr.bf16.mxu0 %v1030
        %1048 = vmatpush1.bf16.msra.mxu0 %v1029
        %1049 = vmatprep.subr.bf16.mxu0 %v1028
        %1050 = vmatpush1.bf16.msra.mxu0 %v1027
        %1051 = vmatprep.subr.bf16.mxu0 %v1026
        %1052 = vmatpush1.bf16.msra.mxu0 %v1025
        %1053 = vmatprep.subr.bf16.mxu0 %v1024
        %1054 = vmatpush1.bf16.msra.mxu0 %v1023
        %1055 = vmatprep.subr.bf16.mxu0 %v1022
        %1056 = vmatpush1.bf16.msra.mxu0 %v1021
        %1057 = vmatprep.subr.bf16.mxu0 %v1020
        %1058 = vmatpush1.bf16.msra.mxu0 %v1019
        %1059 = vmatprep.subr.bf16.mxu0 %v1018
        %1060 = vmatpush1.bf16.msra.mxu0 %v1017
        %1061 = vmatprep.subr.bf16.mxu0 %v1016
        %1062 = vmatpush1.bf16.msra.mxu0 %v1015
        %1063 = vmatprep.subr.bf16.mxu0 0
        %1064 = vmatpush2.bf16.msra.mxu0 0
        %1065 = vmatprep.subr.bf16.mxu0 0
        %1066 = vmatpush2.bf16.msra.mxu0 0
        %1067 = vmatprep.subr.bf16.mxu0 0
        %1068 = vmatpush2.bf16.msra.mxu0 0
        %1069 = vmatprep.subr.bf16.mxu0 0
        %1070 = vmatpush2.bf16.msra.mxu0 0
        %1071 = vmatprep.subr.bf16.mxu0 0
        %1072 = vmatpush2.bf16.msra.mxu0 0
        %1073 = vmatprep.subr.bf16.mxu0 0
        %1074 = vmatpush2.bf16.msra.mxu0 0
        %1075 = vmatprep.subr.bf16.mxu0 0
        %1076 = vmatpush2.bf16.msra.mxu0 0
        %1077 = vmatprep.subr.bf16.mxu0 0
        %1078 = vmatpush2.bf16.msra.mxu0 0
        %1079 = vmatprep.mubr.bf16.mxu0 0
        %1080 = vmatmul.mubr.bf16.gmra.mxu0 %v602
        %v1081 = vpop.f32.mrf.mxu0
        %v1082 = vadd.f32 %v959, %v1081
        %v1083 = vpop.f32.mrf.mxu0
        %v1084 = vadd.f32 %v961, %v1083
        %v1085 = vpop.f32.mrf.mxu0
        %v1086 = vadd.f32 %v963, %v1085
        %v1087 = vpop.f32.mrf.mxu0
        %v1088 = vadd.f32 %v965, %v1087
        %1089 = vdwg.mxu0
        %v1090 = vld [vmem:[%s4] sm:$0x3]
        %v1092 = vlaneseq
        %v1093 = vshrl.u32 %v1092, 7
        %v1094 = vsub.s32 0, %v1093
        %v1095 = vrot.slane %v1090, %v1094
        %v1096 = vlaneseq
        %v1097 = vshrl.u32 %v1096, 7
        %v1098 = vsub.s32 1, %v1097
        %v1099 = vrot.slane %v1090, %v1098
        %v1102 = vadd.f32 %v1082, %v1095
        %v1103 = vadd.f32 %v1084, %v1099
        %v1104 = vadd.f32 %v1086, %v1095
        %v1105 = vadd.f32 %v1088, %v1099
        %v1106 = vxor.u32 %v1102, 2147483648
        %v1107 = vxor.u32 %v1103, 2147483648
        %v1108 = vxor.u32 %v1104, 2147483648
        %v1109 = vxor.u32 %v1105, 2147483648
        %v1110 = vmul.f32 %v1106, 1.442695
        %v1111 = vpow.pop %v1110
        %v1112 = vmul.f32 %v1107, 1.442695
        %v1113 = vpow.pop %v1112
        %v1114 = vmul.f32 %v1108, 1.442695
        %v1115 = vpow.pop %v1114
        %v1116 = vmul.f32 %v1109, 1.442695
        %v1117 = vpow.pop %v1116
        %v1118 = vadd.f32 %v1111, 1.0
        %v1119 = vadd.f32 %v1113, 1.0
        %v1120 = vadd.f32 %v1115, 1.0
        %v1121 = vadd.f32 %v1117, 1.0
        %v1122 = vrcp.pop %v1118
        %v1123 = vmul.f32 1.0, %v1122
        %v1124 = vrcp.pop %v1119
        %v1125 = vmul.f32 1.0, %v1124
        %v1126 = vrcp.pop %v1120
        %v1127 = vmul.f32 1.0, %v1126
        %v1128 = vrcp.pop %v1121
        %v1129 = vmul.f32 1.0, %v1128
        %v1130 = vmul.f32 %v1102, %v1123
        %v1131 = vmul.f32 %v1103, %v1125
        %v1132 = vmul.f32 %v1104, %v1127
        %v1133 = vmul.f32 %v1105, %v1129
        %v1134 = vpack.c.bf16 %v1132, %v1130
        %v1135 = vpack.c.bf16 %v1133, %v1131
        %v1136 = vld [vmem:[%s325] sm:$0xf]
        %v1137 = vld [vmem:[%s325 + $0x4] sm:$0xf]
        %v1138 = vld [vmem:[%s325 + $0x8] sm:$0xf]
        %v1139 = vld [vmem:[%s325 + $0xc] sm:$0xf]
        %v1140 = vld [vmem:[%s325 + $0x10] sm:$0xf]
        %v1141 = vld [vmem:[%s325 + $0x14] sm:$0xf]
        %v1142 = vld [vmem:[%s325 + $0x18] sm:$0xf]
        %v1143 = vld [vmem:[%s325 + $0x1c] sm:$0xf]
        %v1144 = vld [vmem:[%s325 + $0x20] sm:$0xf]
        %v1145 = vld [vmem:[%s325 + $0x24] sm:$0xf]
        %v1146 = vld [vmem:[%s325 + $0x28] sm:$0xf]
        %v1147 = vld [vmem:[%s325 + $0x2c] sm:$0xf]
        %v1148 = vld [vmem:[%s325 + $0x30] sm:$0xf]
        %v1149 = vld [vmem:[%s325 + $0x34] sm:$0xf]
        %v1150 = vld [vmem:[%s325 + $0x38] sm:$0xf]
        %v1151 = vld [vmem:[%s325 + $0x3c] sm:$0xf]
        %v1152 = vld [vmem:[%s325 + $0x40] sm:$0xf]
        %v1153 = vld [vmem:[%s325 + $0x44] sm:$0xf]
        %v1154 = vld [vmem:[%s325 + $0x48] sm:$0xf]
        %v1155 = vld [vmem:[%s325 + $0x4c] sm:$0xf]
        %v1156 = vld [vmem:[%s325 + $0x50] sm:$0xf]
        %v1157 = vld [vmem:[%s325 + $0x54] sm:$0xf]
        %v1158 = vld [vmem:[%s325 + $0x58] sm:$0xf]
        %v1159 = vld [vmem:[%s325 + $0x5c] sm:$0xf]
        %v1160 = vld [vmem:[%s325 + $0x60] sm:$0xf]
        %v1161 = vld [vmem:[%s325 + $0x64] sm:$0xf]
        %v1162 = vld [vmem:[%s325 + $0x68] sm:$0xf]
        %v1163 = vld [vmem:[%s325 + $0x6c] sm:$0xf]
        %v1164 = vld [vmem:[%s325 + $0x70] sm:$0xf]
        %v1165 = vld [vmem:[%s325 + $0x74] sm:$0xf]
        %v1166 = vld [vmem:[%s325 + $0x78] sm:$0xf]
        %v1167 = vld [vmem:[%s325 + $0x7c] sm:$0xf]
        %v1168 = vld [vmem:[%s372] sm:$0x1]
        %v1170 = vlaneseq
        %v1171 = vshrl.u32 %v1170, 7
        %v1172 = vsub.s32 0, %v1171
        %v1173 = vrot.slane %v1168, %v1172
        %v1207 = vunpack.c.l.b16 %v1136
        %v1208 = vunpack.c.l.b16 %v1137
        %v1209 = vunpack.c.l.b16 %v1138
        %v1210 = vunpack.c.l.b16 %v1139
        %v1211 = vunpack.c.l.b16 %v1140
        %v1212 = vunpack.c.l.b16 %v1141
        %v1213 = vunpack.c.l.b16 %v1142
        %v1214 = vunpack.c.l.b16 %v1143
        %v1215 = vunpack.c.l.b16 %v1144
        %v1216 = vunpack.c.l.b16 %v1145
        %v1217 = vunpack.c.l.b16 %v1146
        %v1218 = vunpack.c.l.b16 %v1147
        %v1219 = vunpack.c.l.b16 %v1148
        %v1220 = vunpack.c.l.b16 %v1149
        %v1221 = vunpack.c.l.b16 %v1150
        %v1222 = vunpack.c.l.b16 %v1151
        %v1223 = vunpack.c.l.b16 %v1152
        %v1224 = vunpack.c.l.b16 %v1153
        %v1225 = vunpack.c.l.b16 %v1154
        %v1226 = vunpack.c.l.b16 %v1155
        %v1227 = vunpack.c.l.b16 %v1156
        %v1228 = vunpack.c.l.b16 %v1157
        %v1229 = vunpack.c.l.b16 %v1158
        %v1230 = vunpack.c.l.b16 %v1159
        %v1231 = vunpack.c.l.b16 %v1160
        %v1232 = vunpack.c.l.b16 %v1161
        %v1233 = vunpack.c.l.b16 %v1162
        %v1234 = vunpack.c.l.b16 %v1163
        %v1235 = vunpack.c.l.b16 %v1164
        %v1236 = vunpack.c.l.b16 %v1165
        %v1237 = vunpack.c.l.b16 %v1166
        %v1238 = vunpack.c.l.b16 %v1167
        %v1239 = vpack.c.b16 %v1208, %v1207
        %v1240 = vpack.c.b16 %v1210, %v1209
        %v1241 = vpack.c.b16 %v1212, %v1211
        %v1242 = vpack.c.b16 %v1214, %v1213
        %v1243 = vpack.c.b16 %v1216, %v1215
        %v1244 = vpack.c.b16 %v1218, %v1217
        %v1245 = vpack.c.b16 %v1220, %v1219
        %v1246 = vpack.c.b16 %v1222, %v1221
        %v1247 = vpack.c.b16 %v1224, %v1223
        %v1248 = vpack.c.b16 %v1226, %v1225
        %v1249 = vpack.c.b16 %v1228, %v1227
        %v1250 = vpack.c.b16 %v1230, %v1229
        %v1251 = vpack.c.b16 %v1232, %v1231
        %v1252 = vpack.c.b16 %v1234, %v1233
        %v1253 = vpack.c.b16 %v1236, %v1235
        %v1254 = vpack.c.b16 %v1238, %v1237
        %1271 = vmatprep.subr.bf16.mxu0 0
        %1272 = vmatpush1.bf16.msra.mxu0 %v1246
        %1273 = vmatprep.subr.bf16.mxu0 0
        %1274 = vmatpush1.bf16.msra.mxu0 %v1245
        %1275 = vmatprep.subr.bf16.mxu0 0
        %1276 = vmatpush1.bf16.msra.mxu0 %v1244
        %1277 = vmatprep.subr.bf16.mxu0 0
        %1278 = vmatpush1.bf16.msra.mxu0 %v1243
        %1279 = vmatprep.subr.bf16.mxu0 0
        %1280 = vmatpush1.bf16.msra.mxu0 %v1242
        %1281 = vmatprep.subr.bf16.mxu0 0
        %1282 = vmatpush1.bf16.msra.mxu0 %v1241
        %1283 = vmatprep.subr.bf16.mxu0 0
        %1284 = vmatpush1.bf16.msra.mxu0 %v1240
        %1285 = vmatprep.subr.bf16.mxu0 0
        %1286 = vmatpush1.bf16.msra.mxu0 %v1239
        %1287 = vmatprep.subr.bf16.mxu0 0
        %1288 = vmatpush2.bf16.msra.mxu0 %v1254
        %1289 = vmatprep.subr.bf16.mxu0 0
        %1290 = vmatpush2.bf16.msra.mxu0 %v1253
        %1291 = vmatprep.subr.bf16.mxu0 0
        %1292 = vmatpush2.bf16.msra.mxu0 %v1252
        %1293 = vmatprep.subr.bf16.mxu0 0
        %1294 = vmatpush2.bf16.msra.mxu0 %v1251
        %1295 = vmatprep.subr.bf16.mxu0 0
        %1296 = vmatpush2.bf16.msra.mxu0 %v1250
        %1297 = vmatprep.subr.bf16.mxu0 0
        %1298 = vmatpush2.bf16.msra.mxu0 %v1249
        %1299 = vmatprep.subr.bf16.mxu0 0
        %1300 = vmatpush2.bf16.msra.mxu0 %v1248
        %1301 = vmatprep.subr.bf16.mxu0 0
        %1302 = vmatpush2.bf16.msra.mxu0 %v1247
        %1303 = vmatprep.mubr.bf16.mxu0 %v1135
        %1304 = vmatmul.mubr.bf16.gmra.mxu0 %v1134
        %v1305 = vpop.f32.mrf.mxu0
        %v1306 = vadd.f32 %v1173, %v1305
        %v1307 = vpop.f32.mrf.mxu0
        %v1308 = vpop.f32.mrf.mxu0
        %v1309 = vadd.f32 %v1173, %v1308
        %v1310 = vpop.f32.mrf.mxu0
        %1311 = vdwg.mxu0
        %1312 = vst [vmem:[%s363] sm:$0xff] %v1306
        %1313 = vst [vmem:[%s363 + $0x8] sm:$0xff] %v1309
        %s1314 = sand.u32 %s207, 1
        %s1315 = scalar_lea.sflag [#allocation4], %s1314
        %s1316 = sand.u32 %s207, 1
        %s1317 = smul.addr %s1316, 16
        %s1318 = scalar_lea.vmem [#allocation8], %s1317
        // Predicated region
        $region61: #{tpu_custom_call.1} parent=47 // pred_check
          %p1319 = pneg %p217
        $region62: #{tpu_custom_call.1} parent=47 // pred_check_branch
          %1321 = sbr.rel (%p1319) target = $region64
        $region63: #{tpu_custom_call.1} parent=47 // pred_region
          %s1322 = smul.u32 2, %s28
          %s1324 = ssub.s32 256, 256
          %1325 = vsyncadd %s1315, %s1324
          %s1326 = smul.addr %s1322, 2
          %s1327 = sadd.s32 %s27, %s1326
          %s1328 = smul.addr %s1327, 128
          %s1329 = scalar_lea.hbm %s7, %s1328
          %s1330 = sshll.u32 %s1318, 4
          %s1331 = int_to_ptr.vmem [resolvable:$true] %s1330
          %1336 = dma.vmem_to_hbm [thread:$0]  %s1331, 256, %s1329, %s1315, 128, 256, 8
        $region64: #{tpu_custom_call.1} parent=47 // pred_fallthru
          _
      $region48: #{tpu_custom_call.1} parent=5 // pred_fallthru
        _
      %p1337 = scmp.le.s32.totalorder 2, %s18
      // Predicated region
      $region65: #{tpu_custom_call.1} parent=5 // pred_check
        %p1338 = pneg %p1337
      $region66: #{tpu_custom_call.1} parent=5 // pred_check_branch
        %1340 = sbr.rel (%p1338) target = $region68
      $region67: #{tpu_custom_call.1} parent=5 // pred_region
        %s1341 = ssub.s32 %s18, 2
        // Predicated region
        $region69: #{tpu_custom_call.1} parent=67 // pred_check
          %p1342 = pneg %p223
        $region70: #{tpu_custom_call.1} parent=67 // pred_check_branch
          %1344 = sbr.rel (%p1342) target = $region72
        $region71: #{tpu_custom_call.1} parent=67 // pred_region
          %s1345 = sand.u32 %s208, 1
          %s1346 = scalar_lea.sflag [#allocation4], %s1345
          %s1347 = sand.u32 %s208, 1
          %s1348 = smul.addr %s1347, 16
          %s1349 = scalar_lea.vmem [#allocation8], %s1348
          %1350 = dma.done %s1346, 256
        $region72: #{tpu_custom_call.1} parent=67 // pred_fallthru
          _
      $region68: #{tpu_custom_call.1} parent=5 // pred_fallthru
        _
    $region6: #{tpu_custom_call.1} parent=1 // loop_footer
      %s22 = sadd.s32 1, %s18
    $region7: #{tpu_custom_call.1} parent=1 // loop_footer_branch
      %17 = sbr.rel target = $region3
    $region8: #{tpu_custom_call.1} parent=1 // loop_exit
      _
    %1351 = vsyncpa [#allocation3], 1
    %s1352 = scalar_lea.sflag [#allocation3], 1
    %1353 = vsyncpa %s1352, 1
    %1354 = vsyncpa [#allocation6], 1
    %1355 = vsyncpa [#allocation4], 1
    %s1356 = scalar_lea.sflag [#allocation4], 1
    %1357 = vsyncpa %s1356, 1

</llo_original>
